<compile_context>
chip_gen: v7x
topology: tpu7x:2x2x1
jax: 0.10.0
libtpu: 0.0.40
codegen_flags: <defaults>
</compile_context>

<pallas_src>
import functools

import jax
import jax.numpy as jnp
from jax.experimental import pallas as pl
from jax.experimental.pallas import tpu as pltpu


def _vmem_budget_bytes():
    """Usable VMEM budget for this launch (leave ~25% headroom for the compiler)."""
    try:
        cap = int(pltpu.get_tpu_info().vmem_capacity_bytes)
    except Exception:
        cap = 64 << 20  # conservative default (v7x per-TensorCore size)
    return max(cap * 3 // 4, 32 << 20)


def _largest_divisor_leq(n, cap):
    cap = max(1, min(int(n), int(cap)))
    for d in range(cap, 0, -1):
        if n % d == 0:
            return d
    return 1


# ----------------------------------------------------------------------------
# Single-pass kernel: one (Bt, C, HW) slab per grid step.
# ----------------------------------------------------------------------------
def _se_single_pass_kernel(x_ref, w1_ref, w2_ref, o_ref, *, inv_hw):
    x = x_ref[...]                                               # (Bt, C, HW)
    # Squeeze: global average pool, fp32 accumulation over the lane axis.
    y = jnp.sum(x, axis=-1, dtype=jnp.float32) * inv_hw          # (Bt, C)
    # Excitation: Linear -> ReLU -> Linear -> Sigmoid (tiny, off the roofline).
    h = jnp.maximum(
        jnp.dot(y, w1_ref[...], preferred_element_type=jnp.float32), 0.0)
    s = jax.nn.sigmoid(
        jnp.dot(h, w2_ref[...], preferred_element_type=jnp.float32))
    # Scale: fp32 gate, single cast at the store.
    o_ref[...] = (x * s[:, :, None]).astype(o_ref.dtype)


def _se_single_pass(x3, w1_t, w2_t, B, C, Cr, HW, bt_vmem, budget):
    itemsize = x3.dtype.itemsize
    # Keep >= ~4 grid steps when the batch allows (v7x has 2 TensorCores and
    # we want prefetch overlap); otherwise just take the whole batch.
    bt_cap = max(1, B // 4) if B >= 4 else B
    Bt = _largest_divisor_leq(B, min(bt_vmem, bt_cap))

    cost = pl.CostEstimate(
        flops=3 * B * C * HW + 4 * B * C * Cr,
        transcendentals=B * C,
        bytes_accessed=2 * B * C * HW * itemsize + 4 * (w1_t.size + w2_t.size),
    )
    kernel = functools.partial(_se_single_pass_kernel, inv_hw=1.0 / HW)
    return pl.pallas_call(
        kernel,
        out_shape=jax.ShapeDtypeStruct((B, C, HW), x3.dtype),
        grid=(B // Bt,),
        in_specs=[
            pl.BlockSpec((Bt, C, HW), lambda b: (b, 0, 0)),
            pl.BlockSpec((C, Cr), lambda b: (0, 0)),
            pl.BlockSpec((Cr, C), lambda b: (0, 0)),
        ],
        out_specs=pl.BlockSpec((Bt, C, HW), lambda b: (b, 0, 0)),
        compiler_params=pltpu.CompilerParams(
            dimension_semantics=("parallel",),
            vmem_limit_bytes=int(budget),
        ),
        cost_estimate=cost,
    )(x3, w1_t, w2_t)


# ----------------------------------------------------------------------------
# Two-pass fallback: pass 1 computes the fp32 gate over HW tiles, pass 2 scales.
# ----------------------------------------------------------------------------
def _se_gate_kernel(x_ref, w1_ref, w2_ref, gate_ref, acc_ref, *, inv_hw, hw, thw):
    t = pl.program_id(1)

    @pl.when(t == 0)
    def _():
        acc_ref[...] = jnp.zeros_like(acc_ref)

    x = x_ref[...]                                               # (1, C, Thw)
    # Mask lanes past the true HW (boundary tile reads unspecified padding).
    col = t * thw + jax.lax.broadcasted_iota(jnp.int32, x.shape, 2)
    x = jnp.where(col < hw, x, jnp.zeros_like(x))
    acc_ref[...] += jnp.sum(x, axis=-1, dtype=jnp.float32)       # (1, C)

    @pl.when(t == pl.num_programs(1) - 1)
    def _():
        y = acc_ref[...] * inv_hw
        h = jnp.maximum(
            jnp.dot(y, w1_ref[...], preferred_element_type=jnp.float32), 0.0)
        s = jax.nn.sigmoid(
            jnp.dot(h, w2_ref[...], preferred_element_type=jnp.float32))
        gate_ref[...] = s[:, :, None]                            # (1, C, 1) fp32


def _se_scale_kernel(x_ref, gate_ref, o_ref):
    # fp32 gate broadcast over the lane (spatial) axis; single cast at store.
    o_ref[...] = (x_ref[...] * gate_ref[...]).astype(o_ref.dtype)


def _se_two_pass(x3, w1_t, w2_t, B, C, Cr, HW, avail, budget, hw_tile):
    itemsize = x3.dtype.itemsize
    # Lane-dense HW tile sized to the scale pass budget (in + out, double-buffered).
    thw = (avail // (4 * C * itemsize)) // 128 * 128
    if hw_tile is not None:
        thw = min(thw, int(hw_tile))
    thw = max(128, thw)
    if thw >= HW:
        thw = HW
    # TODO(synk): if even thw=128 exceeds the budget (enormous C), also tile C.
    n_hw = -(-HW // thw)
    inv_hw = 1.0 / HW

    # Pass 1: per-channel sums accumulated across HW tiles -> (B, C, 1) fp32 gate.
    gate_cost = pl.CostEstimate(
        flops=2 * B * C * HW + 4 * B * C * Cr,
        transcendentals=B * C,
        bytes_accessed=B * C * HW * itemsize + 4 * B * C,
    )
    gate_kernel = functools.partial(_se_gate_kernel, inv_hw=inv_hw, hw=HW, thw=thw)
    gate = pl.pallas_call(
        gate_kernel,
        out_shape=jax.ShapeDtypeStruct((B, C, 1), jnp.float32),
        grid=(B, n_hw),
        in_specs=[
            pl.BlockSpec((1, C, thw), lambda b, t: (b, 0, t)),
            pl.BlockSpec((C, Cr), lambda b, t: (0, 0)),
            pl.BlockSpec((Cr, C), lambda b, t: (0, 0)),
        ],
        out_specs=pl.BlockSpec((1, C, 1), lambda b, t: (b, 0, 0)),
        scratch_shapes=[pltpu.VMEM((1, C), jnp.float32)],
        compiler_params=pltpu.CompilerParams(
            dimension_semantics=("parallel", "arbitrary"),
            vmem_limit_bytes=int(budget),
        ),
        cost_estimate=gate_cost,
    )(x3, w1_t, w2_t)

    # Pass 2: pure streaming scale over the same HW tiles.
    scale_cost = pl.CostEstimate(
        flops=B * C * HW,
        transcendentals=0,
        bytes_accessed=2 * B * C * HW * itemsize + 4 * B * C,
    )
    return pl.pallas_call(
        _se_scale_kernel,
        out_shape=jax.ShapeDtypeStruct((B, C, HW), x3.dtype),
        grid=(B, n_hw),
        in_specs=[
            pl.BlockSpec((1, C, thw), lambda b, t: (b, 0, t)),
            pl.BlockSpec((1, C, 1), lambda b, t: (b, 0, 0)),
        ],
        out_specs=pl.BlockSpec((1, C, thw), lambda b, t: (b, 0, t)),
        compiler_params=pltpu.CompilerParams(
            dimension_semantics=("parallel", "parallel"),
            vmem_limit_bytes=int(budget),
        ),
        cost_estimate=scale_cost,
    )(x3, gate)


# ----------------------------------------------------------------------------
# Public wrapper.
# ----------------------------------------------------------------------------
def se_block_pallas(x, w1, w2, *, force_two_pass=False, hw_tile=None):
    """x: (B, C, H, W) NCHW. w1: (Cr, C) = fc[0].weight, w2: (C, Cr) = fc[2].weight."""
    B, C, H, W = x.shape
    HW = H * W
    x3 = x.reshape(B, C, HW)

    # Pre-transpose so the kernel does plain y @ W (PyTorch Linear is y @ W.T).
    w1_t = w1.T  # (C, Cr)
    w2_t = w2.T  # (Cr, C)
    Cr = w1_t.shape[1]

    itemsize = x.dtype.itemsize
    budget = _vmem_budget_bytes()
    weights_bytes = 2 * (w1_t.size + w2_t.size) * w1_t.dtype.itemsize
    slack = 2 << 20
    avail = budget - weights_bytes - slack
    slab = C * HW * itemsize                 # one sample, one direction
    bt_vmem = avail // (4 * slab)            # in + out, double-buffered

    if bt_vmem >= 1 and not force_two_pass:
        out3 = _se_single_pass(x3, w1_t, w2_t, B, C, Cr, HW, bt_vmem, budget)
    else:
        out3 = _se_two_pass(x3, w1_t, w2_t, B, C, Cr, HW, avail, budget, hw_tile)
    return out3.reshape(B, C, H, W)


def se_block_ref(x, w1, w2):
    """Pure-JAX reference mirroring the PyTorch forward."""
    y = jnp.mean(x.astype(jnp.float32), axis=(2, 3))             # (B, C)
    h = jnp.maximum(y @ w1.T.astype(jnp.float32), 0.0)           # (B, Cr)
    s = jax.nn.sigmoid(h @ w2.T.astype(jnp.float32))             # (B, C)
    return (x.astype(jnp.float32) * s[:, :, None, None]).astype(x.dtype)


if __name__ == "__main__":
    # Shapes consistent with the module: channel=32, ratio=16 -> hidden=2.
    B, C, H, W = 2, 32, 16, 16
    ratio = 16
    Cr = C // ratio

    key = jax.random.PRNGKey(0)
    kx, k1, k2, kx2, kx3 = jax.random.split(key, 5)

    x = jax.random.normal(kx, (B, C, H, W), dtype=jnp.float32)
    w1 = jax.random.normal(k1, (Cr, C), dtype=jnp.float32) * 0.1   # fc[0].weight
    w2 = jax.random.normal(k2, (C, Cr), dtype=jnp.float32) * 0.1   # fc[2].weight

    # 1) fp32, HW a multiple of 128 (single-pass path).
    out = jax.block_until_ready(se_block_pallas(x, w1, w2))
    ref = se_block_ref(x, w1, w2)
    assert out.shape == (B, C, H, W)
    assert jnp.allclose(out, ref, atol=1e-5, rtol=1e-5), "fp32 mismatch vs reference"

    # 2) fp32, HW NOT a multiple of 128 (no wrapper-side pad/slice any more).
    xs = jax.random.normal(kx2, (B, C, 10, 10), dtype=jnp.float32)
    out_s = jax.block_until_ready(se_block_pallas(xs, w1, w2))
    ref_s = se_block_ref(xs, w1, w2)
    assert jnp.allclose(out_s, ref_s, atol=1e-5, rtol=1e-5), "non-128 HW mismatch"

    # 3) bf16 input (fp32 gate, single cast at the store).
    xb = x.astype(jnp.bfloat16)
    out_b = jax.block_until_ready(se_block_pallas(xb, w1, w2))
    ref_b = se_block_ref(xb, w1, w2)
    assert jnp.allclose(out_b.astype(jnp.float32), ref_b.astype(jnp.float32),
                        atol=5e-2, rtol=5e-2), "bf16 mismatch vs reference"

    # 4) forced two-pass fallback (the large-slab / v7x path) with a partial
    #    boundary HW tile: 24*24 = 576 = 4*128 + 64.
    xt = jax.random.normal(kx3, (B, C, 24, 24), dtype=jnp.float32)
    out_t = jax.block_until_ready(
        se_block_pallas(xt, w1, w2, force_two_pass=True, hw_tile=128))
    ref_t = se_block_ref(xt, w1, w2)
    assert jnp.allclose(out_t, ref_t, atol=1e-5, rtol=1e-5), "two-pass mismatch"

    print("KERNEL_OK")
</pallas_src>

<mosaic_0001>
module attributes {stable_mosaic.version = 11 : i64} {
  func.func @_se_single_pass_kernel(%arg0: i32, %arg1: memref<2x32x256xf32, #tpu.memory_space<vmem>>, %arg2: memref<32x2xf32, #tpu.memory_space<vmem>>, %arg3: memref<2x32xf32, #tpu.memory_space<vmem>>, %arg4: memref<2x32x256xf32, #tpu.memory_space<vmem>>) attributes {dimension_semantics = [#tpu.dimension_semantics<parallel>], iteration_bounds = array<i64: 1>, scalar_prefetch = 0 : i64, scratch_operands = 0 : i64, tpu.core_type = #tpu.core_type<tc>, window_params = [{transform_indices = @transform_0, window_bounds = array<i64: 2, 32, 256>}, {pipeline_mode = #tpu.pipeline_mode<synchronous>, transform_indices = @transform_1, window_bounds = array<i64: 32, 2>}, {pipeline_mode = #tpu.pipeline_mode<synchronous>, transform_indices = @transform_2, window_bounds = array<i64: 2, 32>}, {transform_indices = @transform_3, window_bounds = array<i64: 2, 32, 256>}]} {
    %c0 = arith.constant 0 : index
    %c0_0 = arith.constant 0 : index
    %c0_1 = arith.constant 0 : index
    %0 = vector.load %arg1[%c0, %c0_0, %c0_1] : memref<2x32x256xf32, #tpu.memory_space<vmem>>, vector<2x32x256xf32>
    %cst = arith.constant dense<0.000000e+00> : vector<2x32xf32>
    %1 = vector.multi_reduction <add>, %0, %cst [2] : vector<2x32x256xf32> to vector<2x32xf32>
    %cst_2 = arith.constant 3.906250e-03 : f32
    %2 = vector.broadcast %cst_2 : f32 to vector<2x32xf32>
    %3 = arith.mulf %1, %2 : vector<2x32xf32>
    %c0_3 = arith.constant 0 : index
    %c0_4 = arith.constant 0 : index
    %4 = vector.load %arg2[%c0_3, %c0_4] : memref<32x2xf32, #tpu.memory_space<vmem>>, vector<32x2xf32>
    %cst_5 = arith.constant dense<0.000000e+00> : vector<2x2xf32>
    %5 = tpu.matmul %3, %4, %cst_5 {dimension_numbers = #tpu.dot_dimension_numbers<[1], [0], [0], [1], [0, 0, 1, 1], [], []>} : vector<2x32xf32>, vector<32x2xf32>, vector<2x2xf32> -> vector<2x2xf32>
    %cst_6 = arith.constant 0.000000e+00 : f32
    %6 = vector.broadcast %cst_6 : f32 to vector<2x2xf32>
    %7 = arith.maximumf %5, %6 : vector<2x2xf32>
    %c0_7 = arith.constant 0 : index
    %c0_8 = arith.constant 0 : index
    %8 = vector.load %arg3[%c0_7, %c0_8] : memref<2x32xf32, #tpu.memory_space<vmem>>, vector<2x32xf32>
    %cst_9 = arith.constant dense<0.000000e+00> : vector<2x32xf32>
    %9 = tpu.matmul %7, %8, %cst_9 {dimension_numbers = #tpu.dot_dimension_numbers<[1], [0], [0], [1], [0, 0, 1, 1], [], []>} : vector<2x2xf32>, vector<2x32xf32>, vector<2x32xf32> -> vector<2x32xf32>
    %10 = arith.negf %9 : vector<2x32xf32>
    %11 = math.exp %10 : vector<2x32xf32>
    %cst_10 = arith.constant 1.000000e+00 : f32
    %12 = vector.broadcast %cst_10 : f32 to vector<2x32xf32>
    %13 = arith.addf %12, %11 : vector<2x32xf32>
    %14 = arith.divf %12, %13 : vector<2x32xf32>
    %15 = vector.shape_cast %14 : vector<2x32xf32> to vector<2x32x1xf32>
    %16 = vector.broadcast %15 : vector<2x32x1xf32> to vector<2x32x256xf32>
    %17 = arith.mulf %0, %16 : vector<2x32x256xf32>
    %c0_11 = arith.constant 0 : index
    %c0_12 = arith.constant 0 : index
    %c0_13 = arith.constant 0 : index
    %18 = vector.load %arg4[%c0_11, %c0_12, %c0_13] : memref<2x32x256xf32, #tpu.memory_space<vmem>>, vector<2x32x256xf32>
    tpu.vector_store %arg4[%c0_11, %c0_12, %c0_13], %17 {strides = array<i32>} : memref<2x32x256xf32, #tpu.memory_space<vmem>>, vector<2x32x256xf32>,
    return
  }
  func.func @transform_0(%arg0: i32) -> (i32, i32, i32) {
    %c0_i32 = arith.constant 0 : i32
    %c0_i32_0 = arith.constant 0 : i32
    %c0_i32_1 = arith.constant 0 : i32
    return %arg0, %c0_i32, %c0_i32_0 : i32, i32, i32
  }
  func.func @transform_1(%arg0: i32) -> (i32, i32) {
    %c0_i32 = arith.constant 0 : i32
    %c0_i32_0 = arith.constant 0 : i32
    %c0_i32_1 = arith.constant 0 : i32
    return %c0_i32, %c0_i32_0 : i32, i32
  }
  func.func @transform_2(%arg0: i32) -> (i32, i32) {
    %c0_i32 = arith.constant 0 : i32
    %c0_i32_0 = arith.constant 0 : i32
    %c0_i32_1 = arith.constant 0 : i32
    return %c0_i32, %c0_i32_0 : i32, i32
  }
  func.func @transform_3(%arg0: i32) -> (i32, i32, i32) {
    %c0_i32 = arith.constant 0 : i32
    %c0_i32_0 = arith.constant 0 : i32
    %c0_i32_1 = arith.constant 0 : i32
    return %arg0, %c0_i32, %c0_i32_0 : i32, i32, i32
  }
}

</mosaic_0001>

<llo_original>
// kernel: tpu_custom_call.1
$region0: #{tpu_custom_call.1}
  #allocation0 [shape = 'u32[]', space=smem, size = 0x4, offset = 0x4, fixed_abs, tag = 'smem constant byte address 0x4 - core index']
  #allocation1 [shape = 'u32[144,128]{1,0:T(1,128)}', space=vmem, size = 0x12000, scoped, tag = 'internal scratch']
  %s0 = inlined_call_operand.hbm [shape: f32[2,32,256], index: 0, kind: input, shape index: {}]
  %s1 = inlined_call_operand.vmem [shape: f32[32,2], index: 1, kind: input, shape index: {}]
  %s2 = inlined_call_operand.vmem [shape: f32[2,32], index: 2, kind: input, shape index: {}]
  %s3 = inlined_call_operand.hbm [shape: f32[2,32,256], index: 3, kind: output, shape index: {}]
  %s4 = sld [smem:[#allocation0]]
  $region26: #{tpu_custom_call.1} parent=0
    _
  %s6 = ssub.s32 1, %s4
  %s7 = scalar_select 0, %s6, %s4
  $region1: #{tpu_custom_call.1} parent=0
    #allocation2 [shape = 'u8[65536]{0}', space=vmem, size = 0x10000, scoped, tag = 'input window, operand 0, single buffered']
    #allocation3 [shape = 's32[1]{0}', space=sflag, size = 0x4, scoped, tag = 'scoped memory for tpu_custom_call.1']
    #allocation4 [shape = 's32[1]{0}', space=sflag, size = 0x4, scoped, tag = 'scoped memory for tpu_custom_call.1']
    #allocation5 [shape = 'u8[65536]{0}', space=vmem, size = 0x10000, scoped, tag = 'output window, operand 0, single buffered']
    %8 = vsyncpa [#allocation3], 0
    %9 = vsyncpa [#allocation4], 0
    // Predicated region
    $region2: #{tpu_custom_call.1} parent=1 // pred_check
      _
    $region3: #{tpu_custom_call.1} parent=1 // pred_check_branch
      %11 = sbr.rel (0) target = $region5
    $region4: #{tpu_custom_call.1} parent=1 // pred_region
      %s13 = ssub.s32 2048, 2048
      %14 = vsyncadd [#allocation3], %s13
      %s15 = sshll.u32 [#allocation2], 4
      %s16 = int_to_ptr.vmem [resolvable:$true] %s15
      %21 = dma.hbm_to_vmem [thread:$0]  %s0, 2048, %s16, [#allocation3], 256, 256, 16
    $region5: #{tpu_custom_call.1} parent=1 // pred_fallthru
      _
    // Predicated region
    $region6: #{tpu_custom_call.1} parent=1 // pred_check
      _
    $region7: #{tpu_custom_call.1} parent=1 // pred_check_branch
      %23 = sbr.rel (0) target = $region9
    $region8: #{tpu_custom_call.1} parent=1 // pred_region
      _
    $region9: #{tpu_custom_call.1} parent=1 // pred_fallthru
      _
    // Predicated region
    $region10: #{tpu_custom_call.1} parent=1 // pred_check
      _
    $region11: #{tpu_custom_call.1} parent=1 // pred_check_branch
      %25 = sbr.rel (0) target = $region13
    $region12: #{tpu_custom_call.1} parent=1 // pred_region
      _
    $region13: #{tpu_custom_call.1} parent=1 // pred_fallthru
      _
    // Predicated region
    $region14: #{tpu_custom_call.1} parent=1 // pred_check
      _
    $region15: #{tpu_custom_call.1} parent=1 // pred_check_branch
      %27 = sbr.rel (0) target = $region17
    $region16: #{tpu_custom_call.1} parent=1 // pred_region
      %28 = dma.done [#allocation3], 2048
    $region17: #{tpu_custom_call.1} parent=1 // pred_fallthru
      _
    %v29 = vld [vmem:[#allocation2] sm:$0xff]
    %v30 = vld [vmem:[#allocation2 + $0x8] sm:$0xff]
    %v31 = vld [vmem:[#allocation2 + $0x10] sm:$0xff]
    %v32 = vld [vmem:[#allocation2 + $0x18] sm:$0xff]
    %v33 = vld [vmem:[#allocation2 + $0x20] sm:$0xff]
    %v34 = vld [vmem:[#allocation2 + $0x28] sm:$0xff]
    %v35 = vld [vmem:[#allocation2 + $0x30] sm:$0xff]
    %v36 = vld [vmem:[#allocation2 + $0x38] sm:$0xff]
    %v37 = vld [vmem:[#allocation2 + $0x40] sm:$0xff]
    %v38 = vld [vmem:[#allocation2 + $0x48] sm:$0xff]
    %v39 = vld [vmem:[#allocation2 + $0x50] sm:$0xff]
    %v40 = vld [vmem:[#allocation2 + $0x58] sm:$0xff]
    %v41 = vld [vmem:[#allocation2 + $0x60] sm:$0xff]
    %v42 = vld [vmem:[#allocation2 + $0x68] sm:$0xff]
    %v43 = vld [vmem:[#allocation2 + $0x70] sm:$0xff]
    %v44 = vld [vmem:[#allocation2 + $0x78] sm:$0xff]
    %v45 = vadd.f32 %v29, %v30
    %46 = vadd.xlane.f32.xlu0 %v45
    %v47 = vpop.xlane.xlu0 %46
    %v48 = vadd.f32 %v31, %v32
    %49 = vadd.xlane.f32.xlu0 %v48
    %v50 = vpop.xlane.xlu0 %49
    %v51 = vadd.f32 %v33, %v34
    %52 = vadd.xlane.f32.xlu0 %v51
    %v53 = vpop.xlane.xlu0 %52
    %v54 = vadd.f32 %v35, %v36
    %55 = vadd.xlane.f32.xlu0 %v54
    %v56 = vpop.xlane.xlu0 %55
    %v57 = vadd.f32 %v37, %v38
    %58 = vadd.xlane.f32.xlu0 %v57
    %v59 = vpop.xlane.xlu0 %58
    %v60 = vadd.f32 %v39, %v40
    %61 = vadd.xlane.f32.xlu0 %v60
    %v62 = vpop.xlane.xlu0 %61
    %v63 = vadd.f32 %v41, %v42
    %64 = vadd.xlane.f32.xlu0 %v63
    %v65 = vpop.xlane.xlu0 %64
    %v66 = vadd.f32 %v43, %v44
    %67 = vadd.xlane.f32.xlu0 %v66
    %v68 = vpop.xlane.xlu0 %67
    %v69 = vmul.f32 %v47, 0.00390625
    %v70 = vmul.f32 %v50, 0.00390625
    %v71 = vmul.f32 %v53, 0.00390625
    %v72 = vmul.f32 %v56, 0.00390625
    %v73 = vmul.f32 %v59, 0.00390625
    %v74 = vmul.f32 %v62, 0.00390625
    %v75 = vmul.f32 %v65, 0.00390625
    %v76 = vmul.f32 %v68, 0.00390625
    %v77 = vld [vmem:[%s1] sm:$0xff]
    %v78 = vld [vmem:[%s1 + $0x8] sm:$0xff]
    %v79 = vld [vmem:[%s1 + $0x10] sm:$0xff]
    %v80 = vld [vmem:[%s1 + $0x18] sm:$0xff]
    %v89 = vlaneseq
    %v90 = vand.u32 %v89, 127
    %v91 = vlaneseq
    %v92 = vshrl.u32 %v91, 7
    %v93 = vsub.s32 %v90, %v92
    %v94 = vrot.slane %v69, %v93
    %v95 = vadd.s32 %v90, 4294967288
    %v96 = vlaneseq
    %v97 = vshrl.u32 %v96, 7
    %v98 = vsub.s32 %v95, %v97
    %v99 = vrot.slane %v70, %v98
    %vm100 = vcmask 130112
    %v101 = vsel %vm100, %v99, %v94
    %v102 = vadd.s32 %v90, 4294967280
    %v103 = vlaneseq
    %v104 = vshrl.u32 %v103, 7
    %v105 = vsub.s32 %v102, %v104
    %v106 = vrot.slane %v71, %v105
    %vm107 = vcmask 195712
    %v108 = vsel %vm107, %v106, %v101
    %v109 = vadd.s32 %v90, 4294967272
    %v110 = vlaneseq
    %v111 = vshrl.u32 %v110, 7
    %v112 = vsub.s32 %v109, %v111
    %v113 = vrot.slane %v72, %v112
    %vm114 = vcmask 261312
    %v115 = vsel %vm114, %v113, %v108
    %v116 = vlaneseq
    %v117 = vshrl.u32 %v116, 7
    %v118 = vsub.s32 %v90, %v117
    %v119 = vrot.slane %v73, %v118
    %v120 = vlaneseq
    %v121 = vshrl.u32 %v120, 7
    %v122 = vsub.s32 %v95, %v121
    %v123 = vrot.slane %v74, %v122
    %v124 = vsel %vm100, %v123, %v119
    %v125 = vlaneseq
    %v126 = vshrl.u32 %v125, 7
    %v127 = vsub.s32 %v102, %v126
    %v128 = vrot.slane %v75, %v127
    %v129 = vsel %vm107, %v128, %v124
    %v130 = vlaneseq
    %v131 = vshrl.u32 %v130, 7
    %v132 = vsub.s32 %v109, %v131
    %v133 = vrot.slane %v76, %v132
    %v134 = vsel %vm114, %v133, %v129
    %vm135 = vcmask 1041409
    %v136 = vsel %vm135, %v134, %v115
    %vm137 = vcmask 261120
    %v138 = vsel %vm137, %v136, 0
    %140 = vmatprep.subr.mxu0 0.0
    %141 = vmatpush1.msra.mxu0 %v77
    %142 = vmatprep.subr.mxu0 0.0
    %143 = vmatpush1.msra.mxu0 %v78
    %144 = vmatprep.subr.mxu0 0.0
    %145 = vmatpush1.msra.mxu0 %v79
    %146 = vmatprep.subr.mxu0 0.0
    %147 = vmatpush1.msra.mxu0 %v80
    %148 = vmatprep.subr.mxu0 0.0
    %149 = vmatpush1.msra.mxu0 0.0
    %150 = vmatprep.subr.mxu0 0.0
    %151 = vmatpush1.msra.mxu0 0.0
    %152 = vmatprep.subr.mxu0 0.0
    %153 = vmatpush1.msra.mxu0 0.0
    %154 = vmatprep.subr.mxu0 0.0
    %155 = vmatpush1.msra.mxu0 0.0
    %156 = vmatprep.subr.mxu0 0.0
    %157 = vmatpush1.msra.mxu0 0.0
    %158 = vmatprep.subr.mxu0 0.0
    %159 = vmatpush1.msra.mxu0 0.0
    %160 = vmatprep.subr.mxu0 0.0
    %161 = vmatpush1.msra.mxu0 0.0
    %162 = vmatprep.subr.mxu0 0.0
    %163 = vmatpush1.msra.mxu0 0.0
    %164 = vmatprep.subr.mxu0 0.0
    %165 = vmatpush1.msra.mxu0 0.0
    %166 = vmatprep.subr.mxu0 0.0
    %167 = vmatpush1.msra.mxu0 0.0
    %168 = vmatprep.subr.mxu0 0.0
    %169 = vmatpush1.msra.mxu0 0.0
    %170 = vmatprep.subr.mxu0 0.0
    %171 = vmatpush1.msra.mxu0 0.0
    %172 = vmatprep.subr.mxu0 0.0
    %173 = vmatpush1.msra.mxu0 0.0
    %174 = vmatprep.subr.mxu0 0.0
    %175 = vmatpush1.msra.mxu0 0.0
    %176 = vmatprep.subr.mxu0 0.0
    %177 = vmatpush1.msra.mxu0 0.0
    %178 = vmatprep.subr.mxu0 0.0
    %179 = vmatpush1.msra.mxu0 0.0
    %180 = vmatprep.subr.mxu0 0.0
    %181 = vmatpush1.msra.mxu0 0.0
    %182 = vmatprep.subr.mxu0 0.0
    %183 = vmatpush1.msra.mxu0 0.0
    %184 = vmatprep.subr.mxu0 0.0
    %185 = vmatpush1.msra.mxu0 0.0
    %186 = vmatprep.subr.mxu0 0.0
    %187 = vmatpush1.msra.mxu0 0.0
    %188 = vmatprep.subr.mxu0 0.0
    %189 = vmatpush1.msra.mxu0 0.0
    %190 = vmatprep.subr.mxu0 0.0
    %191 = vmatpush1.msra.mxu0 0.0
    %192 = vmatprep.subr.mxu0 0.0
    %193 = vmatpush1.msra.mxu0 0.0
    %194 = vmatprep.subr.mxu0 0.0
    %195 = vmatpush1.msra.mxu0 0.0
    %196 = vmatprep.subr.mxu0 0.0
    %197 = vmatpush1.msra.mxu0 0.0
    %198 = vmatprep.subr.mxu0 0.0
    %199 = vmatpush1.msra.mxu0 0.0
    %200 = vmatprep.subr.mxu0 0.0
    %201 = vmatpush1.msra.mxu0 0.0
    %202 = vmatprep.subr.mxu0 0.0
    %203 = vmatpush1.msra.mxu0 0.0
    %204 = vmatprep.mubr.f32.mxu0 0.0
    %205 = vmatmul.mubr.f32.gmra.mrb[0].mxu0 %v138
    %v206 = vpop.f32.mrb[0].mxu0
    %v207 = vadd.f32 0.0, %v206
    %v208 = vpop.f32.mrb[0].mxu0
    %209 = vdwg.mxu0
    %v210 = vmax.f32 %v207, 0.0
    %v211 = vld [vmem:[%s2] sm:$0x3]
    %vm212 = vcmask 15360
    %v214 = vsel %vm212, %v210, 0
    %vm216 = vcmask 1041408
    %v218 = vsel %vm216, %v211, 0
    %220 = vmatprep.subr.mxu0 0.0
    %221 = vmatpush1.msra.mxu0 %v218
    %222 = vmatprep.subr.mxu0 0.0
    %223 = vmatpush1.msra.mxu0 0.0
    %224 = vmatprep.subr.mxu0 0.0
    %225 = vmatpush1.msra.mxu0 0.0
    %226 = vmatprep.subr.mxu0 0.0
    %227 = vmatpush1.msra.mxu0 0.0
    %228 = vmatprep.subr.mxu0 0.0
    %229 = vmatpush1.msra.mxu0 0.0
    %230 = vmatprep.subr.mxu0 0.0
    %231 = vmatpush1.msra.mxu0 0.0
    %232 = vmatprep.subr.mxu0 0.0
    %233 = vmatpush1.msra.mxu0 0.0
    %234 = vmatprep.subr.mxu0 0.0
    %235 = vmatpush1.msra.mxu0 0.0
    %236 = vmatprep.subr.mxu0 0.0
    %237 = vmatpush1.msra.mxu0 0.0
    %238 = vmatprep.subr.mxu0 0.0
    %239 = vmatpush1.msra.mxu0 0.0
    %240 = vmatprep.subr.mxu0 0.0
    %241 = vmatpush1.msra.mxu0 0.0
    %242 = vmatprep.subr.mxu0 0.0
    %243 = vmatpush1.msra.mxu0 0.0
    %244 = vmatprep.subr.mxu0 0.0
    %245 = vmatpush1.msra.mxu0 0.0
    %246 = vmatprep.subr.mxu0 0.0
    %247 = vmatpush1.msra.mxu0 0.0
    %248 = vmatprep.subr.mxu0 0.0
    %249 = vmatpush1.msra.mxu0 0.0
    %250 = vmatprep.subr.mxu0 0.0
    %251 = vmatpush1.msra.mxu0 0.0
    %252 = vmatprep.subr.mxu0 0.0
    %253 = vmatpush1.msra.mxu0 0.0
    %254 = vmatprep.subr.mxu0 0.0
    %255 = vmatpush1.msra.mxu0 0.0
    %256 = vmatprep.subr.mxu0 0.0
    %257 = vmatpush1.msra.mxu0 0.0
    %258 = vmatprep.subr.mxu0 0.0
    %259 = vmatpush1.msra.mxu0 0.0
    %260 = vmatprep.subr.mxu0 0.0
    %261 = vmatpush1.msra.mxu0 0.0
    %262 = vmatprep.subr.mxu0 0.0
    %263 = vmatpush1.msra.mxu0 0.0
    %264 = vmatprep.subr.mxu0 0.0
    %265 = vmatpush1.msra.mxu0 0.0
    %266 = vmatprep.subr.mxu0 0.0
    %267 = vmatpush1.msra.mxu0 0.0
    %268 = vmatprep.subr.mxu0 0.0
    %269 = vmatpush1.msra.mxu0 0.0
    %270 = vmatprep.subr.mxu0 0.0
    %271 = vmatpush1.msra.mxu0 0.0
    %272 = vmatprep.subr.mxu0 0.0
    %273 = vmatpush1.msra.mxu0 0.0
    %274 = vmatprep.subr.mxu0 0.0
    %275 = vmatpush1.msra.mxu0 0.0
    %276 = vmatprep.subr.mxu0 0.0
    %277 = vmatpush1.msra.mxu0 0.0
    %278 = vmatprep.subr.mxu0 0.0
    %279 = vmatpush1.msra.mxu0 0.0
    %280 = vmatprep.subr.mxu0 0.0
    %281 = vmatpush1.msra.mxu0 0.0
    %282 = vmatprep.subr.mxu0 0.0
    %283 = vmatpush1.msra.mxu0 0.0
    %284 = vmatprep.mubr.f32.mxu0 0.0
    %285 = vmatmul.mubr.f32.gmra.mrb[0].mxu0 %v214
    %v286 = vpop.f32.mrb[0].mxu0
    %v287 = vadd.f32 0.0, %v286
    %v288 = vpop.f32.mrb[0].mxu0
    %289 = vdwg.mxu0
    %v290 = vxor.u32 %v287, 2147483648
    %v291 = vmul.f32 %v290, 1.442695
    %v292 = vpow.pop %v291
    %v293 = vadd.f32 %v292, 1.0
    %v294 = vrcp.pop %v293
    %v295 = vmul.f32 1.0, %v294
    %v296 = vlaneseq
    %v297 = vshrl.u32 %v296, 7
    %v298 = vsub.s32 0, %v297
    %v299 = vrot.slane %v295, %v298
    %301 = vbcast.lane.b32.xlu0 %v299, 256
    %v302 = vpop.permute.xlu0 %301
    %s304 = sor.u32 256, 8
    %305 = vbcast.lane.b32.xlu0 %v299, %s304
    %v306 = vpop.permute.xlu0 %305
    %s308 = sor.u32 256, 16
    %309 = vbcast.lane.b32.xlu0 %v299, %s308
    %v310 = vpop.permute.xlu0 %309
    %s312 = sor.u32 256, 24
    %313 = vbcast.lane.b32.xlu0 %v299, %s312
    %v314 = vpop.permute.xlu0 %313
    %v315 = vlaneseq
    %v316 = vshrl.u32 %v315, 7
    %v317 = vsub.s32 1, %v316
    %v318 = vrot.slane %v295, %v317
    %320 = vbcast.lane.b32.xlu0 %v318, 256
    %v321 = vpop.permute.xlu0 %320
    %s323 = sor.u32 256, 8
    %324 = vbcast.lane.b32.xlu0 %v318, %s323
    %v325 = vpop.permute.xlu0 %324
    %s327 = sor.u32 256, 16
    %328 = vbcast.lane.b32.xlu0 %v318, %s327
    %v329 = vpop.permute.xlu0 %328
    %s331 = sor.u32 256, 24
    %332 = vbcast.lane.b32.xlu0 %v318, %s331
    %v333 = vpop.permute.xlu0 %332
    %v334 = vmul.f32 %v29, %v302
    %v335 = vmul.f32 %v30, %v302
    %v336 = vmul.f32 %v31, %v306
    %v337 = vmul.f32 %v32, %v306
    %v338 = vmul.f32 %v33, %v310
    %v339 = vmul.f32 %v34, %v310
    %v340 = vmul.f32 %v35, %v314
    %v341 = vmul.f32 %v36, %v314
    %v342 = vmul.f32 %v37, %v321
    %v343 = vmul.f32 %v38, %v321
    %v344 = vmul.f32 %v39, %v325
    %v345 = vmul.f32 %v40, %v325
    %v346 = vmul.f32 %v41, %v329
    %v347 = vmul.f32 %v42, %v329
    %v348 = vmul.f32 %v43, %v333
    %v349 = vmul.f32 %v44, %v333
    %350 = vst [vmem:[#allocation5] sm:$0xff] %v334
    %351 = vst [vmem:[#allocation5 + $0x8] sm:$0xff] %v335
    %352 = vst [vmem:[#allocation5 + $0x10] sm:$0xff] %v336
    %353 = vst [vmem:[#allocation5 + $0x18] sm:$0xff] %v337
    %354 = vst [vmem:[#allocation5 + $0x20] sm:$0xff] %v338
    %355 = vst [vmem:[#allocation5 + $0x28] sm:$0xff] %v339
    %356 = vst [vmem:[#allocation5 + $0x30] sm:$0xff] %v340
    %357 = vst [vmem:[#allocation5 + $0x38] sm:$0xff] %v341
    %358 = vst [vmem:[#allocation5 + $0x40] sm:$0xff] %v342
    %359 = vst [vmem:[#allocation5 + $0x48] sm:$0xff] %v343
    %360 = vst [vmem:[#allocation5 + $0x50] sm:$0xff] %v344
    %361 = vst [vmem:[#allocation5 + $0x58] sm:$0xff] %v345
    %362 = vst [vmem:[#allocation5 + $0x60] sm:$0xff] %v346
    %363 = vst [vmem:[#allocation5 + $0x68] sm:$0xff] %v347
    %364 = vst [vmem:[#allocation5 + $0x70] sm:$0xff] %v348
    %365 = vst [vmem:[#allocation5 + $0x78] sm:$0xff] %v349
    // Predicated region
    $region18: #{tpu_custom_call.1} parent=1 // pred_check
      _
    $region19: #{tpu_custom_call.1} parent=1 // pred_check_branch
      %367 = sbr.rel (0) target = $region21
    $region20: #{tpu_custom_call.1} parent=1 // pred_region
      %s369 = ssub.s32 2048, 2048
      %370 = vsyncadd [#allocation4], %s369
      %s371 = sshll.u32 [#allocation5], 4
      %s372 = int_to_ptr.vmem [resolvable:$true] %s371
      %377 = dma.vmem_to_hbm [thread:$0]  %s372, 2048, %s3, [#allocation4], 256, 256, 16
    $region21: #{tpu_custom_call.1} parent=1 // pred_fallthru
      _
    // Predicated region
    $region22: #{tpu_custom_call.1} parent=1 // pred_check
      _
    $region23: #{tpu_custom_call.1} parent=1 // pred_check_branch
      %379 = sbr.rel (0) target = $region25
    $region24: #{tpu_custom_call.1} parent=1 // pred_region
      %380 = dma.done [#allocation4], 2048
    $region25: #{tpu_custom_call.1} parent=1 // pred_fallthru
      _
    %381 = vsyncpa [#allocation3], 1
    %382 = vsyncpa [#allocation4], 1

</llo_original>
